<compile_context>
chip_gen: v7x
topology: tpu7x:2x2x1
jax: 0.10.0
libtpu: 0.0.40
codegen_flags: <defaults>
</compile_context>

<pallas_src>
import jax
import jax.numpy as jnp
from jax import lax
from jax.experimental import pallas as pl
from jax.experimental.pallas import tpu as pltpu

EPS = 1e-5
LANE = 128


def _round_up(x, m):
    return ((x + m - 1) // m) * m


# ---------------- Pass 1: conv matmul + per-channel sum / sum-of-squares ----------------
def conv_stats_kernel(p_ref, w_ref, y_ref, stats_ref):
    # p_ref: (TILE_M, K_pad) bf16;   w_ref: (K_pad, O_pad) bf16
    # y_ref: (TILE_M, O_pad) f32;    stats_ref: (2, O_pad) f32  [row0 = sum, row1 = sum(y*y)]
    i = pl.program_id(0)

    @pl.when(i == 0)
    def _():
        stats_ref[...] = jnp.zeros_like(stats_ref)

    y = jnp.dot(p_ref[...], w_ref[...], preferred_element_type=jnp.float32)
    y_ref[...] = y

    s = jnp.sum(y, axis=0, keepdims=True)
    ss = jnp.sum(y * y, axis=0, keepdims=True)
    stats_ref[...] += jnp.concatenate([s, ss], axis=0)


# ---------------- Pass 2: normalize + affine + ReLU (lane-dense elementwise) ----------------
def bn_relu_kernel(y_ref, scale_ref, shift_ref, o_ref):
    o_ref[...] = jnp.maximum(y_ref[...] * scale_ref[...] + shift_ref[...], 0.0)


def conv_block_pallas(x_nchw, weight, bias, gamma, beta, *, stride=1, padding=0, tile_m=256):
    """x_nchw: (N, Cin, H, W); weight: (O, Cin, kH, kW); bias/gamma/beta: (O,)."""
    n, cin, h, w = x_nchw.shape
    o, _, kh, kw = weight.shape

    # Conv bias is added before training-mode BatchNorm -> cancelled by mean subtraction.
    del bias

    if padding > 0:
        x_nchw = jnp.pad(x_nchw, ((0, 0), (0, 0), (padding, padding), (padding, padding)))
        h, w = h + 2 * padding, w + 2 * padding

    oh = (h - kh) // stride + 1
    ow = (w - kw) // stride + 1

    # --- glue: NCHW -> NHWC and im2col (plain JAX) ---
    x_nhwc = jnp.transpose(x_nchw, (0, 2, 3, 1))  # (N, H, W, Cin)
    slices = []
    for ky in range(kh):
        for kx in range(kw):
            slices.append(x_nhwc[:, ky:ky + stride * oh:stride, kx:kx + stride * ow:stride, :])
    patches = jnp.stack(slices, axis=3).reshape(n * oh * ow, kh * kw * cin)  # (M, K)

    m_rows, k = patches.shape
    k_pad = _round_up(k, LANE)
    o_pad = _round_up(o, LANE)
    m_pad = _round_up(m_rows, tile_m)
    num_tiles = m_pad // tile_m

    # Zero-pad to aligned shapes; bf16 operands for the MXU.
    patches_p = jnp.pad(patches, ((0, m_pad - m_rows), (0, k_pad - k))).astype(jnp.bfloat16)
    w_mat = jnp.transpose(weight, (2, 3, 1, 0)).reshape(k, o)  # (K, O), matches patch ordering
    w_p = jnp.pad(w_mat, ((0, k_pad - k), (0, o_pad - o))).astype(jnp.bfloat16)

    # ---- pass 1: conv + batch statistics ----
    y_full, stats = pl.pallas_call(
        conv_stats_kernel,
        out_shape=(
            jax.ShapeDtypeStruct((m_pad, o_pad), jnp.float32),
            jax.ShapeDtypeStruct((2, o_pad), jnp.float32),
        ),
        grid_spec=pltpu.PrefetchScalarGridSpec(
            num_scalar_prefetch=0,
            grid=(num_tiles,),
            in_specs=[
                pl.BlockSpec((tile_m, k_pad), lambda i: (i, 0)),
                pl.BlockSpec((k_pad, o_pad), lambda i: (0, 0)),
            ],
            out_specs=[
                pl.BlockSpec((tile_m, o_pad), lambda i: (i, 0)),
                pl.BlockSpec((2, o_pad), lambda i: (0, 0)),  # resident accumulator
            ],
        ),
        compiler_params=pltpu.CompilerParams(
            dimension_semantics=("arbitrary",),  # stats accumulator carried across M tiles
            vmem_limit_bytes=32 * 1024 * 1024,
        ),
    )(patches_p, w_p)

    # ---- tiny O(channels) glue: fold BN into per-channel scale/shift ----
    inv_m = 1.0 / float(m_rows)                  # true row count; padded rows contributed 0
    mean = stats[0:1, :] * inv_m
    ex2 = stats[1:2, :] * inv_m
    var = ex2 - mean * mean                      # biased variance (training-mode BN)
    gamma_p = jnp.pad(gamma.astype(jnp.float32), (0, o_pad - o)).reshape(1, o_pad)
    beta_p = jnp.pad(beta.astype(jnp.float32), (0, o_pad - o)).reshape(1, o_pad)
    scale = gamma_p * lax.rsqrt(var + EPS)
    shift = beta_p - mean * scale

    # ---- pass 2: normalize + affine + ReLU ----
    out_flat = pl.pallas_call(
        bn_relu_kernel,
        out_shape=jax.ShapeDtypeStruct((m_pad, o_pad), jnp.float32),
        grid_spec=pltpu.PrefetchScalarGridSpec(
            num_scalar_prefetch=0,
            grid=(num_tiles,),
            in_specs=[
                pl.BlockSpec((tile_m, o_pad), lambda i: (i, 0)),
                pl.BlockSpec((1, o_pad), lambda i: (0, 0)),
                pl.BlockSpec((1, o_pad), lambda i: (0, 0)),
            ],
            out_specs=pl.BlockSpec((tile_m, o_pad), lambda i: (i, 0)),
        ),
        compiler_params=pltpu.CompilerParams(
            dimension_semantics=("parallel",),   # independent tiles -> megacore shardable
            vmem_limit_bytes=32 * 1024 * 1024,
        ),
    )(y_full, scale, shift)

    # (M_pad, O_pad) -> slice valid region -> (N, OH, OW, O) -> NCHW
    out = out_flat[:m_rows, :o].reshape(n, oh, ow, o)
    return jnp.transpose(out, (0, 3, 1, 2))


def conv_block_reference(x_nchw, weight, bias, gamma, beta, *, stride=1, padding=0):
    """Pure-JAX reference matching PyTorch ConvBlock forward (training-mode BN)."""
    y = lax.conv_general_dilated(
        x_nchw.astype(jnp.float32), weight.astype(jnp.float32),
        window_strides=(stride, stride),
        padding=[(padding, padding), (padding, padding)],
        dimension_numbers=("NCHW", "OIHW", "NCHW"),
    ) + bias.reshape(1, -1, 1, 1)
    mean = jnp.mean(y, axis=(0, 2, 3), keepdims=True)
    var = jnp.mean((y - mean) ** 2, axis=(0, 2, 3), keepdims=True)
    y_hat = (y - mean) * lax.rsqrt(var + EPS)
    y = y_hat * gamma.reshape(1, -1, 1, 1) + beta.reshape(1, -1, 1, 1)
    return jnp.maximum(y, 0.0)


if __name__ == "__main__":
    key = jax.random.PRNGKey(0)
    k_x, k_w, k_b, k_g, k_be = jax.random.split(key, 5)

    # Small shapes consistent with the module: N=2, Cin=4, H=W=16, Cout=8, k=3, stride=1, pad=0.
    N, CIN, H, W = 2, 4, 16, 16
    COUT, KH, KW = 8, 3, 3

    x = jax.random.normal(k_x, (N, CIN, H, W), dtype=jnp.float32)
    weight = jax.random.normal(k_w, (COUT, CIN, KH, KW), dtype=jnp.float32) * 0.1
    bias = jax.random.normal(k_b, (COUT,), dtype=jnp.float32) * 0.1
    gamma = 1.0 + 0.1 * jax.random.normal(k_g, (COUT,), dtype=jnp.float32)
    beta = 0.1 * jax.random.normal(k_be, (COUT,), dtype=jnp.float32)

    out = conv_block_pallas(x, weight, bias, gamma, beta, stride=1, padding=0)
    out = jax.block_until_ready(out)

    ref = conv_block_reference(x, weight, bias, gamma, beta, stride=1, padding=0)
    assert out.shape == (N, COUT, H - KH + 1, W - KW + 1), out.shape
    # Tolerance relaxed vs a pure-f32 reference because MXU operands are bf16 (f32 accumulate).
    assert jnp.allclose(out, ref, atol=2e-2, rtol=2e-2), float(jnp.max(jnp.abs(out - ref)))

    print("KERNEL_OK")
</pallas_src>

<mosaic_0001>
module attributes {stable_mosaic.version = 11 : i64} {
  func.func @conv_stats_kernel(%arg0: i32, %arg1: memref<256x128xbf16, #tpu.memory_space<vmem>>, %arg2: memref<128x128xbf16, #tpu.memory_space<vmem>>, %arg3: memref<256x128xf32, #tpu.memory_space<vmem>>, %arg4: memref<2x128xf32, #tpu.memory_space<vmem>>) attributes {dimension_semantics = [#tpu.dimension_semantics<arbitrary>], iteration_bounds = array<i64: 2>, scalar_prefetch = 0 : i64, scratch_operands = 0 : i64, tpu.core_type = #tpu.core_type<tc>, window_params = [{transform_indices = @transform_0, window_bounds = array<i64: 256, 128>}, {pipeline_mode = #tpu.pipeline_mode<synchronous>, transform_indices = @transform_1, window_bounds = array<i64: 128, 128>}, {transform_indices = @transform_2, window_bounds = array<i64: 256, 128>}, {pipeline_mode = #tpu.pipeline_mode<synchronous>, transform_indices = @transform_3, window_bounds = array<i64: 2, 128>}]} {
    %c0_i32 = arith.constant 0 : i32
    %0 = arith.cmpi eq, %arg0, %c0_i32 : i32
    %1 = arith.extui %0 : i1 to i32
    %c0_i32_0 = arith.constant 0 : i32
    %2 = arith.cmpi ne, %1, %c0_i32_0 : i32
    scf.if %2 {
      %cst_12 = arith.constant 0.000000e+00 : f32
      %16 = vector.broadcast %cst_12 : f32 to vector<2x128xf32>
      %c0_13 = arith.constant 0 : index
      %c0_14 = arith.constant 0 : index
      %17 = vector.load %arg4[%c0_13, %c0_14] : memref<2x128xf32, #tpu.memory_space<vmem>>, vector<2x128xf32>
      tpu.vector_store %arg4[%c0_13, %c0_14], %16 {strides = array<i32>} : memref<2x128xf32, #tpu.memory_space<vmem>>, vector<2x128xf32>,
    } else {
    }
    %c0 = arith.constant 0 : index
    %c0_1 = arith.constant 0 : index
    %3 = vector.load %arg1[%c0, %c0_1] : memref<256x128xbf16, #tpu.memory_space<vmem>>, vector<256x128xbf16>
    %c0_2 = arith.constant 0 : index
    %c0_3 = arith.constant 0 : index
    %4 = vector.load %arg2[%c0_2, %c0_3] : memref<128x128xbf16, #tpu.memory_space<vmem>>, vector<128x128xbf16>
    %cst = arith.constant dense<0.000000e+00> : vector<256x128xf32>
    %5 = tpu.matmul %3, %4, %cst {dimension_numbers = #tpu.dot_dimension_numbers<[1], [0], [0], [1], [0, 0, 1, 1], [], []>} : vector<256x128xbf16>, vector<128x128xbf16>, vector<256x128xf32> -> vector<256x128xf32>
    %c0_4 = arith.constant 0 : index
    %c0_5 = arith.constant 0 : index
    %6 = vector.load %arg3[%c0_4, %c0_5] : memref<256x128xf32, #tpu.memory_space<vmem>>, vector<256x128xf32>
    tpu.vector_store %arg3[%c0_4, %c0_5], %5 {strides = array<i32>} : memref<256x128xf32, #tpu.memory_space<vmem>>, vector<256x128xf32>,
    %cst_6 = arith.constant dense<0.000000e+00> : vector<128xf32>
    %7 = vector.multi_reduction <add>, %5, %cst_6 [0] : vector<256x128xf32> to vector<128xf32>
    %8 = vector.shape_cast %7 : vector<128xf32> to vector<1x128xf32>
    %9 = arith.mulf %5, %5 : vector<256x128xf32>
    %cst_7 = arith.constant dense<0.000000e+00> : vector<128xf32>
    %10 = vector.multi_reduction <add>, %9, %cst_7 [0] : vector<256x128xf32> to vector<128xf32>
    %11 = vector.shape_cast %10 : vector<128xf32> to vector<1x128xf32>
    %c0_8 = arith.constant 0 : index
    %c0_9 = arith.constant 0 : index
    %12 = vector.load %arg4[%c0_8, %c0_9] : memref<2x128xf32, #tpu.memory_space<vmem>>, vector<2x128xf32>
    %13 = tpu.concatenate %8, %11 in 0 : vector<1x128xf32>, vector<1x128xf32> -> vector<2x128xf32>
    %14 = arith.addf %12, %13 : vector<2x128xf32>
    %c0_10 = arith.constant 0 : index
    %c0_11 = arith.constant 0 : index
    %15 = vector.load %arg4[%c0_10, %c0_11] : memref<2x128xf32, #tpu.memory_space<vmem>>, vector<2x128xf32>
    tpu.vector_store %arg4[%c0_10, %c0_11], %14 {strides = array<i32>} : memref<2x128xf32, #tpu.memory_space<vmem>>, vector<2x128xf32>,
    return
  }
  func.func @transform_0(%arg0: i32) -> (i32, i32) {
    %c0_i32 = arith.constant 0 : i32
    %c0_i32_0 = arith.constant 0 : i32
    return %arg0, %c0_i32 : i32, i32
  }
  func.func @transform_1(%arg0: i32) -> (i32, i32) {
    %c0_i32 = arith.constant 0 : i32
    %c0_i32_0 = arith.constant 0 : i32
    %c0_i32_1 = arith.constant 0 : i32
    return %c0_i32, %c0_i32_0 : i32, i32
  }
  func.func @transform_2(%arg0: i32) -> (i32, i32) {
    %c0_i32 = arith.constant 0 : i32
    %c0_i32_0 = arith.constant 0 : i32
    return %arg0, %c0_i32 : i32, i32
  }
  func.func @transform_3(%arg0: i32) -> (i32, i32) {
    %c0_i32 = arith.constant 0 : i32
    %c0_i32_0 = arith.constant 0 : i32
    %c0_i32_1 = arith.constant 0 : i32
    return %c0_i32, %c0_i32_0 : i32, i32
  }
}

</mosaic_0001>

<llo_original>
// kernel: tpu_custom_call.1
$region0: #{tpu_custom_call.1}
  #allocation0 [shape = 'u32[]', space=smem, size = 0x4, offset = 0x4, fixed_abs, tag = 'smem constant byte address 0x4 - core index']
  #allocation1 [shape = 'u32[144,128]{1,0:T(1,128)}', space=vmem, size = 0x12000, scoped, tag = 'internal scratch']
  %s0 = inlined_call_operand.hbm [shape: bf16[512,128], index: 0, kind: input, shape index: {}]
  %s1 = inlined_call_operand.hbm [shape: bf16[128,128], index: 1, kind: input, shape index: {}]
  %s2 = inlined_call_operand.hbm [shape: f32[512,128], index: 2, kind: output, shape index: {0}]
  %s3 = inlined_call_operand.hbm [shape: f32[2,128], index: 3, kind: output, shape index: {1}]
  %4 = xla_tuple %s2, %s3
  %s5 = sld [smem:[#allocation0]]
  $region61: #{tpu_custom_call.1} parent=0
    _
  %s7 = ssub.s32 1, %s5
  %s8 = scalar_select 0, %s7, %s5
  $region1: #{tpu_custom_call.1} parent=0
    #allocation2 [shape = 'u8[131072]{0}', space=vmem, size = 0x20000, scoped, tag = 'input window, operand 0']
    #allocation3 [shape = 's32[2]{0}', space=sflag, size = 0x8, scoped, tag = 'scoped memory for tpu_custom_call.1']
    #allocation4 [shape = 's32[2]{0}', space=sflag, size = 0x8, scoped, tag = 'scoped memory for tpu_custom_call.1']
    #allocation5 [shape = 'u8[32768]{0}', space=vmem, size = 0x8000, scoped, tag = 'input window, operand 1, single buffered']
    #allocation6 [shape = 's32[1]{0}', space=sflag, size = 0x4, scoped, tag = 'scoped memory for tpu_custom_call.1']
    #allocation7 [shape = 'u8[262144]{0}', space=vmem, size = 0x40000, scoped, tag = 'output window, operand 0']
    #allocation8 [shape = 'u8[1024]{0}', space=vmem, size = 0x400, scoped, tag = 'output window, operand 1, single buffered']
    #allocation9 [shape = 's32[1]{0}', space=sflag, size = 0x4, scoped, tag = 'scoped memory for tpu_custom_call.1']
    %9 = vsyncpa [#allocation3], 0
    %s10 = scalar_lea.sflag [#allocation3], 1
    %11 = vsyncpa %s10, 0
    %12 = vsyncpa [#allocation6], 0
    %13 = vsyncpa [#allocation4], 0
    %s14 = scalar_lea.sflag [#allocation4], 1
    %15 = vsyncpa %s14, 0
    %16 = vsyncpa [#allocation9], 0
    loop: start=0, step=1, limit=4
    $region2: #{tpu_custom_call.1} parent=1 // loop_pre_header
      _
    $region3: #{tpu_custom_call.1} parent=1 // loop_header
      %s18 = sphi 0, %s22
      %p19 = scmp.ge.s32.totalorder %s18, 4
      %s28 = sphi 0, %s30
      %s31 = sphi 0, %s28
      %s32 = sphi 0, %s31
      %s48 = sphi 0, %s32
      %s52 = sphi 0, %s52
      %s54 = sphi 0, %s52
      %s55 = sphi 0, %s54
      %s69 = sphi 0, %s55
      %s75 = sphi 0, %s77
      %s78 = sphi 0, %s75
      %s79 = sphi 0, %s78
      %s95 = sphi 0, %s79
      %s99 = sphi 0, %s99
      %s101 = sphi 0, %s99
      %s102 = sphi 0, %s101
      %s116 = sphi 0, %s102
    $region4: #{tpu_custom_call.1} parent=1 // loop_header_branch
      %21 = sbr.rel (%p19) target = $region8
    $region5: #{tpu_custom_call.1} parent=1 // loop_body
      %s23 = ssub.s32 %s18, 1
      %s24 = ssub.s32 %s18, 2
      %s25 = sadd.s32 %s18, 1
      %s26 = ssub.s32 %s18, %s25
      %p27 = scmp.eq.s32.totalorder %s26, 0
      %s29 = sadd.s32 %s28, 1
      %s30 = scalar_select %p27, %s28, %s29
      %p33 = pneg %p27
      %p34 = scmp.eq.s32.totalorder %s18, 1
      %p35 = por %p33, %p34
      %p36 = scmp.ne.s32.totalorder %s28, %s31
      %p37 = scmp.eq.s32.totalorder %s18, 0
      %p38 = por %p36, %p37
      %p39 = scmp.ne.s32.totalorder %s28, %s31
      %p40 = scmp.eq.s32.totalorder %s23, 1
      %p41 = por %p39, %p40
      %p42 = scmp.ne.s32.totalorder %s31, %s32
      %p43 = scmp.eq.s32.totalorder %s23, 0
      %p44 = por %p42, %p43
      %p45 = scmp.ne.s32.totalorder %s31, %s32
      %p46 = scmp.eq.s32.totalorder %s24, 1
      %p47 = por %p45, %p46
      %p49 = scmp.ne.s32.totalorder %s32, %s48
      %p50 = scmp.eq.s32.totalorder %s24, 0
      %p51 = por %p49, %p50
      %s53 = sadd.s32 %s52, 1
      %p56 = scmp.eq.s32.totalorder %s18, 1
      %p57 = scmp.ne.s32.totalorder %s52, %s54
      %p58 = scmp.eq.s32.totalorder %s18, 0
      %p59 = por %p57, %p58
      %p60 = scmp.ne.s32.totalorder %s52, %s54
      %p61 = scmp.eq.s32.totalorder %s23, 1
      %p62 = por %p60, %p61
      %p63 = scmp.ne.s32.totalorder %s54, %s55
      %p64 = scmp.eq.s32.totalorder %s23, 0
      %p65 = por %p63, %p64
      %p66 = scmp.ne.s32.totalorder %s54, %s55
      %p67 = scmp.eq.s32.totalorder %s24, 1
      %p68 = por %p66, %p67
      %p70 = scmp.ne.s32.totalorder %s55, %s69
      %p71 = scmp.eq.s32.totalorder %s24, 0
      %p72 = por %p70, %p71
      %s73 = ssub.s32 %s18, %s25
      %p74 = scmp.eq.s32.totalorder %s73, 0
      %s76 = sadd.s32 %s75, 1
      %s77 = scalar_select %p74, %s75, %s76
      %p80 = pneg %p74
      %p81 = scmp.eq.s32.totalorder %s18, 1
      %p82 = por %p80, %p81
      %p83 = scmp.ne.s32.totalorder %s75, %s78
      %p84 = scmp.eq.s32.totalorder %s18, 0
      %p85 = por %p83, %p84
      %p86 = scmp.ne.s32.totalorder %s75, %s78
      %p87 = scmp.eq.s32.totalorder %s23, 1
      %p88 = por %p86, %p87
      %p89 = scmp.ne.s32.totalorder %s78, %s79
      %p90 = scmp.eq.s32.totalorder %s23, 0
      %p91 = por %p89, %p90
      %p92 = scmp.ne.s32.totalorder %s78, %s79
      %p93 = scmp.eq.s32.totalorder %s24, 1
      %p94 = por %p92, %p93
      %p96 = scmp.ne.s32.totalorder %s79, %s95
      %p97 = scmp.eq.s32.totalorder %s24, 0
      %p98 = por %p96, %p97
      %s100 = sadd.s32 %s99, 1
      %p103 = scmp.eq.s32.totalorder %s18, 1
      %p104 = scmp.ne.s32.totalorder %s99, %s101
      %p105 = scmp.eq.s32.totalorder %s18, 0
      %p106 = por %p104, %p105
      %p107 = scmp.ne.s32.totalorder %s99, %s101
      %p108 = scmp.eq.s32.totalorder %s23, 1
      %p109 = por %p107, %p108
      %p110 = scmp.ne.s32.totalorder %s101, %s102
      %p111 = scmp.eq.s32.totalorder %s23, 0
      %p112 = por %p110, %p111
      %p113 = scmp.ne.s32.totalorder %s101, %s102
      %p114 = scmp.eq.s32.totalorder %s24, 1
      %p115 = por %p113, %p114
      %p117 = scmp.ne.s32.totalorder %s102, %s116
      %p118 = scmp.eq.s32.totalorder %s24, 0
      %p119 = por %p117, %p118
      %p120 = scmp.le.s32.totalorder 1, %s18
      %p121 = scmp.lt.s32.totalorder %s18, 3
      %p122 = pnand %p120, %p121
      %p123 = pneg %p122
      // Predicated region
      $region9: #{tpu_custom_call.1} parent=5 // pred_check
        _
      $region10: #{tpu_custom_call.1} parent=5 // pred_check_branch
        %125 = sbr.rel (%p122) target = $region12
      $region11: #{tpu_custom_call.1} parent=5 // pred_region
        %s126 = ssub.s32 %s18, 1
        // Predicated region
        $region13: #{tpu_custom_call.1} parent=11 // pred_check
          %p127 = pneg %p65
        $region14: #{tpu_custom_call.1} parent=11 // pred_check_branch
          %129 = sbr.rel (%p127) target = $region16
        $region15: #{tpu_custom_call.1} parent=11 // pred_region
          %s131 = ssub.s32 1024, 1024
          %132 = vsyncadd [#allocation6], %s131
          %s133 = sshll.u32 [#allocation5], 4
          %s134 = int_to_ptr.vmem [resolvable:$true] %s133
          %139 = dma.hbm_to_vmem [thread:$0]  %s1, 1024, %s134, [#allocation6], 64, 64, 4
        $region16: #{tpu_custom_call.1} parent=11 // pred_fallthru
          _
      $region12: #{tpu_custom_call.1} parent=5 // pred_fallthru
        _
      %p140 = scmp.lt.s32.totalorder %s18, 2
      // Predicated region
      $region17: #{tpu_custom_call.1} parent=5 // pred_check
        %p141 = pneg %p140
      $region18: #{tpu_custom_call.1} parent=5 // pred_check_branch
        %143 = sbr.rel (%p141) target = $region20
      $region19: #{tpu_custom_call.1} parent=5 // pred_region
        // Predicated region
        $region21: #{tpu_custom_call.1} parent=19 // pred_check
          %p144 = pneg %p38
        $region22: #{tpu_custom_call.1} parent=19 // pred_check_branch
          %146 = sbr.rel (%p144) target = $region24
        $region23: #{tpu_custom_call.1} parent=19 // pred_region
          %s147 = sand.u32 %s28, 1
          %s148 = scalar_lea.sflag [#allocation3], %s147
          %s149 = sand.u32 %s28, 1
          %s150 = smul.addr %s149, 128
          %s151 = scalar_lea.vmem [#allocation2], %s150
          %s152 = smul.u32 32, %s18
          %s154 = ssub.s32 2048, 2048
          %155 = vsyncadd %s148, %s154
          %s156 = smul.addr %s152, 64
          %s157 = scalar_lea.hbm %s0, %s156
          %s158 = sshll.u32 %s151, 4
          %s159 = int_to_ptr.vmem [resolvable:$true] %s158
          %164 = dma.hbm_to_vmem [thread:$0]  %s157, 2048, %s159, %s148, 64, 64, 4
        $region24: #{tpu_custom_call.1} parent=19 // pred_fallthru
          _
      $region20: #{tpu_custom_call.1} parent=5 // pred_fallthru
        _
      %p165 = scmp.le.s32.totalorder 1, %s18
      %p166 = scmp.lt.s32.totalorder %s18, 3
      %p167 = pnand %p165, %p166
      %p168 = pneg %p167
      // Predicated region
      $region25: #{tpu_custom_call.1} parent=5 // pred_check
        _
      $region26: #{tpu_custom_call.1} parent=5 // pred_check_branch
        %170 = sbr.rel (%p167) target = $region28
      $region27: #{tpu_custom_call.1} parent=5 // pred_region
        %s171 = ssub.s32 %s18, 1
        %s172 = sand.u32 %s31, 1
        %s173 = scalar_lea.sflag [#allocation3], %s172
        %s174 = sand.u32 %s31, 1
        %s175 = smul.addr %s174, 128
        %s176 = scalar_lea.vmem [#allocation2], %s175
        // Predicated region
        $region29: #{tpu_custom_call.1} parent=27 // pred_check
          %p177 = pneg %p44
        $region30: #{tpu_custom_call.1} parent=27 // pred_check_branch
          %179 = sbr.rel (%p177) target = $region32
        $region31: #{tpu_custom_call.1} parent=27 // pred_region
          %180 = dma.done %s173, 2048
        $region32: #{tpu_custom_call.1} parent=27 // pred_fallthru
          _
        // Predicated region
        $region33: #{tpu_custom_call.1} parent=27 // pred_check
          %p181 = pneg %p65
        $region34: #{tpu_custom_call.1} parent=27 // pred_check_branch
          %183 = sbr.rel (%p181) target = $region36
        $region35: #{tpu_custom_call.1} parent=27 // pred_region
          %184 = dma.done [#allocation6], 1024
        $region36: #{tpu_custom_call.1} parent=27 // pred_fallthru
          _
        %s185 = sand.u32 %s31, 1
        %s186 = scalar_lea.sflag [#allocation3], %s185
        %s187 = sand.u32 %s31, 1
        %s188 = smul.addr %s187, 128
        %s189 = scalar_lea.vmem [#allocation2], %s188
        %p190 = pneg %p44
        %p191 = pneg %p41
        %p192 = pneg %p65
        %p193 = pneg %p62
        %p194 = pneg %p91
        %p195 = pneg %p88
        %s196 = sand.u32 %s78, 1
        %s197 = scalar_lea.sflag [#allocation4], %s196
        %s198 = sand.u32 %s78, 1
        %s199 = smul.addr %s198, 256
        %s200 = scalar_lea.vmem [#allocation7], %s199
        %p201 = pneg %p112
        %p202 = pneg %p109
        %s203 = smul.u32 32, %s23
        %s204 = smul.u32 32, %s23
        %p206 = scmp.eq.s32.totalorder %s23, 0
        // Predicated region
        $region37: #{tpu_custom_call.1} parent=27 // pred_check
          %p207 = pneg %p206
        $region38: #{tpu_custom_call.1} parent=27 // pred_check_branch
          %209 = sbr.rel (%p207) target = $region40
        $region39: #{tpu_custom_call.1} parent=27 // pred_region
          %210 = vst [vmem:[#allocation8] sm:$0x3] 0.0
        $region40: #{tpu_custom_call.1} parent=27 // pred_fallthru
          _
        %v211 = vld [vmem:[%s176] sm:$0xf]
        %v212 = vld [vmem:[%s176 + $0x4] sm:$0xf]
        %v213 = vld [vmem:[%s176 + $0x8] sm:$0xf]
        %v214 = vld [vmem:[%s176 + $0xc] sm:$0xf]
        %v215 = vld [vmem:[%s176 + $0x10] sm:$0xf]
        %v216 = vld [vmem:[%s176 + $0x14] sm:$0xf]
        %v217 = vld [vmem:[%s176 + $0x18] sm:$0xf]
        %v218 = vld [vmem:[%s176 + $0x1c] sm:$0xf]
        %v219 = vld [vmem:[%s176 + $0x20] sm:$0xf]
        %v220 = vld [vmem:[%s176 + $0x24] sm:$0xf]
        %v221 = vld [vmem:[%s176 + $0x28] sm:$0xf]
        %v222 = vld [vmem:[%s176 + $0x2c] sm:$0xf]
        %v223 = vld [vmem:[%s176 + $0x30] sm:$0xf]
        %v224 = vld [vmem:[%s176 + $0x34] sm:$0xf]
        %v225 = vld [vmem:[%s176 + $0x38] sm:$0xf]
        %v226 = vld [vmem:[%s176 + $0x3c] sm:$0xf]
        %v227 = vld [vmem:[%s176 + $0x40] sm:$0xf]
        %v228 = vld [vmem:[%s176 + $0x44] sm:$0xf]
        %v229 = vld [vmem:[%s176 + $0x48] sm:$0xf]
        %v230 = vld [vmem:[%s176 + $0x4c] sm:$0xf]
        %v231 = vld [vmem:[%s176 + $0x50] sm:$0xf]
        %v232 = vld [vmem:[%s176 + $0x54] sm:$0xf]
        %v233 = vld [vmem:[%s176 + $0x58] sm:$0xf]
        %v234 = vld [vmem:[%s176 + $0x5c] sm:$0xf]
        %v235 = vld [vmem:[%s176 + $0x60] sm:$0xf]
        %v236 = vld [vmem:[%s176 + $0x64] sm:$0xf]
        %v237 = vld [vmem:[%s176 + $0x68] sm:$0xf]
        %v238 = vld [vmem:[%s176 + $0x6c] sm:$0xf]
        %v239 = vld [vmem:[%s176 + $0x70] sm:$0xf]
        %v240 = vld [vmem:[%s176 + $0x74] sm:$0xf]
        %v241 = vld [vmem:[%s176 + $0x78] sm:$0xf]
        %v242 = vld [vmem:[%s176 + $0x7c] sm:$0xf]
        %v243 = vld [vmem:[#allocation5] sm:$0xf]
        %v244 = vld [vmem:[#allocation5 + $0x4] sm:$0xf]
        %v245 = vld [vmem:[#allocation5 + $0x8] sm:$0xf]
        %v246 = vld [vmem:[#allocation5 + $0xc] sm:$0xf]
        %v247 = vld [vmem:[#allocation5 + $0x10] sm:$0xf]
        %v248 = vld [vmem:[#allocation5 + $0x14] sm:$0xf]
        %v249 = vld [vmem:[#allocation5 + $0x18] sm:$0xf]
        %v250 = vld [vmem:[#allocation5 + $0x1c] sm:$0xf]
        %v251 = vld [vmem:[#allocation5 + $0x20] sm:$0xf]
        %v252 = vld [vmem:[#allocation5 + $0x24] sm:$0xf]
        %v253 = vld [vmem:[#allocation5 + $0x28] sm:$0xf]
        %v254 = vld [vmem:[#allocation5 + $0x2c] sm:$0xf]
        %v255 = vld [vmem:[#allocation5 + $0x30] sm:$0xf]
        %v256 = vld [vmem:[#allocation5 + $0x34] sm:$0xf]
        %v257 = vld [vmem:[#allocation5 + $0x38] sm:$0xf]
        %v258 = vld [vmem:[#allocation5 + $0x3c] sm:$0xf]
        %v291 = vunpack.c.l.b16 %v211
        %v292 = vunpack.c.l.b16 %v212
        %v293 = vunpack.c.l.b16 %v213
        %v294 = vunpack.c.l.b16 %v214
        %v295 = vunpack.c.l.b16 %v215
        %v296 = vunpack.c.l.b16 %v216
        %v297 = vunpack.c.l.b16 %v217
        %v298 = vunpack.c.l.b16 %v218
        %v299 = vunpack.c.l.b16 %v219
        %v300 = vunpack.c.l.b16 %v220
        %v301 = vunpack.c.l.b16 %v221
        %v302 = vunpack.c.l.b16 %v222
        %v303 = vunpack.c.l.b16 %v223
        %v304 = vunpack.c.l.b16 %v224
        %v305 = vunpack.c.l.b16 %v225
        %v306 = vunpack.c.l.b16 %v226
        %v307 = vunpack.c.l.b16 %v227
        %v308 = vunpack.c.l.b16 %v228
        %v309 = vunpack.c.l.b16 %v229
        %v310 = vunpack.c.l.b16 %v230
        %v311 = vunpack.c.l.b16 %v231
        %v312 = vunpack.c.l.b16 %v232
        %v313 = vunpack.c.l.b16 %v233
        %v314 = vunpack.c.l.b16 %v234
        %v315 = vunpack.c.l.b16 %v235
        %v316 = vunpack.c.l.b16 %v236
        %v317 = vunpack.c.l.b16 %v237
        %v318 = vunpack.c.l.b16 %v238
        %v319 = vunpack.c.l.b16 %v239
        %v320 = vunpack.c.l.b16 %v240
        %v321 = vunpack.c.l.b16 %v241
        %v322 = vunpack.c.l.b16 %v242
        %v323 = vpack.c.b16 %v292, %v291
        %v324 = vpack.c.b16 %v294, %v293
        %v325 = vpack.c.b16 %v296, %v295
        %v326 = vpack.c.b16 %v298, %v297
        %v327 = vpack.c.b16 %v300, %v299
        %v328 = vpack.c.b16 %v302, %v301
        %v329 = vpack.c.b16 %v304, %v303
        %v330 = vpack.c.b16 %v306, %v305
        %v331 = vpack.c.b16 %v308, %v307
        %v332 = vpack.c.b16 %v310, %v309
        %v333 = vpack.c.b16 %v312, %v311
        %v334 = vpack.c.b16 %v314, %v313
        %v335 = vpack.c.b16 %v316, %v315
        %v336 = vpack.c.b16 %v318, %v317
        %v337 = vpack.c.b16 %v320, %v319
        %v338 = vpack.c.b16 %v322, %v321
        %v371 = vunpack.c.l.b16 %v243
        %v372 = vunpack.c.l.b16 %v244
        %v373 = vunpack.c.l.b16 %v245
        %v374 = vunpack.c.l.b16 %v246
        %v375 = vunpack.c.l.b16 %v247
        %v376 = vunpack.c.l.b16 %v248
        %v377 = vunpack.c.l.b16 %v249
        %v378 = vunpack.c.l.b16 %v250
        %v379 = vunpack.c.l.b16 %v251
        %v380 = vunpack.c.l.b16 %v252
        %v381 = vunpack.c.l.b16 %v253
        %v382 = vunpack.c.l.b16 %v254
        %v383 = vunpack.c.l.b16 %v255
        %v384 = vunpack.c.l.b16 %v256
        %v385 = vunpack.c.l.b16 %v257
        %v386 = vunpack.c.l.b16 %v258
        %v387 = vpack.c.b16 %v372, %v371
        %v388 = vpack.c.b16 %v374, %v373
        %v389 = vpack.c.b16 %v376, %v375
        %v390 = vpack.c.b16 %v378, %v377
        %v391 = vpack.c.b16 %v380, %v379
        %v392 = vpack.c.b16 %v382, %v381
        %v393 = vpack.c.b16 %v384, %v383
        %v394 = vpack.c.b16 %v386, %v385
        %403 = vmatprep.subr.bf16.mxu0 0
        %404 = vmatpush1.bf16.msra.mxu0 %v387
        %405 = vmatprep.subr.bf16.mxu0 0
        %406 = vmatpush1.bf16.msra.mxu0 %v388
        %407 = vmatprep.subr.bf16.mxu0 0
        %408 = vmatpush1.bf16.msra.mxu0 %v389
        %409 = vmatprep.subr.bf16.mxu0 0
        %410 = vmatpush1.bf16.msra.mxu0 %v390
        %411 = vmatprep.subr.bf16.mxu0 0
        %412 = vmatpush1.bf16.msra.mxu0 %v391
        %413 = vmatprep.subr.bf16.mxu0 0
        %414 = vmatpush1.bf16.msra.mxu0 %v392
        %415 = vmatprep.subr.bf16.mxu0 0
        %416 = vmatpush1.bf16.msra.mxu0 %v393
        %417 = vmatprep.subr.bf16.mxu0 0
        %418 = vmatpush1.bf16.msra.mxu0 %v394
        %419 = vmatprep.subr.bf16.mxu0 0
        %420 = vmatpush1.bf16.msra.mxu0 0
        %421 = vmatprep.subr.bf16.mxu0 0
        %422 = vmatpush1.bf16.msra.mxu0 0
        %423 = vmatprep.subr.bf16.mxu0 0
        %424 = vmatpush1.bf16.msra.mxu0 0
        %425 = vmatprep.subr.bf16.mxu0 0
        %426 = vmatpush1.bf16.msra.mxu0 0
        %427 = vmatprep.subr.bf16.mxu0 0
        %428 = vmatpush1.bf16.msra.mxu0 0
        %429 = vmatprep.subr.bf16.mxu0 0
        %430 = vmatpush1.bf16.msra.mxu0 0
        %431 = vmatprep.subr.bf16.mxu0 0
        %432 = vmatpush1.bf16.msra.mxu0 0
        %433 = vmatprep.subr.bf16.mxu0 0
        %434 = vmatpush1.bf16.msra.mxu0 0
        %435 = vmatprep.mubr.bf16.mxu0 0
        %436 = vmatmul.mubr.bf16.gmra.mrb[0].mxu0 %v323
        %v437 = vpop.f32.mrb[0].mxu0
        %v438 = vadd.f32 0.0, %v437
        %v439 = vpop.f32.mrb[0].mxu0
        %v440 = vpop.f32.mrb[0].mxu0
        %v441 = vadd.f32 0.0, %v440
        %v442 = vpop.f32.mrb[0].mxu0
        %443 = vmatprep.mubr.bf16.mxu0 0
        %444 = vmatmul.mubr.bf16.gmra.mrb[0].mxu0 %v324
        %v445 = vpop.f32.mrb[0].mxu0
        %v446 = vadd.f32 0.0, %v445
        %v447 = vpop.f32.mrb[0].mxu0
        %v448 = vpop.f32.mrb[0].mxu0
        %v449 = vadd.f32 0.0, %v448
        %v450 = vpop.f32.mrb[0].mxu0
        %451 = vmatprep.mubr.bf16.mxu0 0
        %452 = vmatmul.mubr.bf16.gmra.mrb[0].mxu0 %v325
        %v453 = vpop.f32.mrb[0].mxu0
        %v454 = vadd.f32 0.0, %v453
        %v455 = vpop.f32.mrb[0].mxu0
        %v456 = vpop.f32.mrb[0].mxu0
        %v457 = vadd.f32 0.0, %v456
        %v458 = vpop.f32.mrb[0].mxu0
        %459 = vmatprep.mubr.bf16.mxu0 0
        %460 = vmatmul.mubr.bf16.gmra.mrb[0].mxu0 %v326
        %v461 = vpop.f32.mrb[0].mxu0
        %v462 = vadd.f32 0.0, %v461
        %v463 = vpop.f32.mrb[0].mxu0
        %v464 = vpop.f32.mrb[0].mxu0
        %v465 = vadd.f32 0.0, %v464
        %v466 = vpop.f32.mrb[0].mxu0
        %467 = vmatprep.mubr.bf16.mxu0 0
        %468 = vmatmul.mubr.bf16.gmra.mrb[0].mxu0 %v327
        %v469 = vpop.f32.mrb[0].mxu0
        %v470 = vadd.f32 0.0, %v469
        %v471 = vpop.f32.mrb[0].mxu0
        %v472 = vpop.f32.mrb[0].mxu0
        %v473 = vadd.f32 0.0, %v472
        %v474 = vpop.f32.mrb[0].mxu0
        %475 = vmatprep.mubr.bf16.mxu0 0
        %476 = vmatmul.mubr.bf16.gmra.mrb[0].mxu0 %v328
        %v477 = vpop.f32.mrb[0].mxu0
        %v478 = vadd.f32 0.0, %v477
        %v479 = vpop.f32.mrb[0].mxu0
        %v480 = vpop.f32.mrb[0].mxu0
        %v481 = vadd.f32 0.0, %v480
        %v482 = vpop.f32.mrb[0].mxu0
        %483 = vmatprep.mubr.bf16.mxu0 0
        %484 = vmatmul.mubr.bf16.gmra.mrb[0].mxu0 %v329
        %v485 = vpop.f32.mrb[0].mxu0
        %v486 = vadd.f32 0.0, %v485
        %v487 = vpop.f32.mrb[0].mxu0
        %v488 = vpop.f32.mrb[0].mxu0
        %v489 = vadd.f32 0.0, %v488
        %v490 = vpop.f32.mrb[0].mxu0
        %491 = vmatprep.mubr.bf16.mxu0 0
        %492 = vmatmul.mubr.bf16.gmra.mrb[0].mxu0 %v330
        %v493 = vpop.f32.mrb[0].mxu0
        %v494 = vadd.f32 0.0, %v493
        %v495 = vpop.f32.mrb[0].mxu0
        %v496 = vpop.f32.mrb[0].mxu0
        %v497 = vadd.f32 0.0, %v496
        %v498 = vpop.f32.mrb[0].mxu0
        %499 = vmatprep.mubr.bf16.mxu0 0
        %500 = vmatmul.mubr.bf16.gmra.mrb[0].mxu0 %v331
        %v501 = vpop.f32.mrb[0].mxu0
        %v502 = vadd.f32 0.0, %v501
        %v503 = vpop.f32.mrb[0].mxu0
        %v504 = vpop.f32.mrb[0].mxu0
        %v505 = vadd.f32 0.0, %v504
        %v506 = vpop.f32.mrb[0].mxu0
        %507 = vmatprep.mubr.bf16.mxu0 0
        %508 = vmatmul.mubr.bf16.gmra.mrb[0].mxu0 %v332
        %v509 = vpop.f32.mrb[0].mxu0
        %v510 = vadd.f32 0.0, %v509
        %v511 = vpop.f32.mrb[0].mxu0
        %v512 = vpop.f32.mrb[0].mxu0
        %v513 = vadd.f32 0.0, %v512
        %v514 = vpop.f32.mrb[0].mxu0
        %515 = vmatprep.mubr.bf16.mxu0 0
        %516 = vmatmul.mubr.bf16.gmra.mrb[0].mxu0 %v333
        %v517 = vpop.f32.mrb[0].mxu0
        %v518 = vadd.f32 0.0, %v517
        %v519 = vpop.f32.mrb[0].mxu0
        %v520 = vpop.f32.mrb[0].mxu0
        %v521 = vadd.f32 0.0, %v520
        %v522 = vpop.f32.mrb[0].mxu0
        %523 = vmatprep.mubr.bf16.mxu0 0
        %524 = vmatmul.mubr.bf16.gmra.mrb[0].mxu0 %v334
        %v525 = vpop.f32.mrb[0].mxu0
        %v526 = vadd.f32 0.0, %v525
        %v527 = vpop.f32.mrb[0].mxu0
        %v528 = vpop.f32.mrb[0].mxu0
        %v529 = vadd.f32 0.0, %v528
        %v530 = vpop.f32.mrb[0].mxu0
        %531 = vmatprep.mubr.bf16.mxu0 0
        %532 = vmatmul.mubr.bf16.gmra.mrb[0].mxu0 %v335
        %v533 = vpop.f32.mrb[0].mxu0
        %v534 = vadd.f32 0.0, %v533
        %v535 = vpop.f32.mrb[0].mxu0
        %v536 = vpop.f32.mrb[0].mxu0
        %v537 = vadd.f32 0.0, %v536
        %v538 = vpop.f32.mrb[0].mxu0
        %539 = vmatprep.mubr.bf16.mxu0 0
        %540 = vmatmul.mubr.bf16.gmra.mrb[0].mxu0 %v336
        %v541 = vpop.f32.mrb[0].mxu0
        %v542 = vadd.f32 0.0, %v541
        %v543 = vpop.f32.mrb[0].mxu0
        %v544 = vpop.f32.mrb[0].mxu0
        %v545 = vadd.f32 0.0, %v544
        %v546 = vpop.f32.mrb[0].mxu0
        %547 = vmatprep.mubr.bf16.mxu0 0
        %548 = vmatmul.mubr.bf16.gmra.mrb[0].mxu0 %v337
        %v549 = vpop.f32.mrb[0].mxu0
        %v550 = vadd.f32 0.0, %v549
        %v551 = vpop.f32.mrb[0].mxu0
        %v552 = vpop.f32.mrb[0].mxu0
        %v553 = vadd.f32 0.0, %v552
        %v554 = vpop.f32.mrb[0].mxu0
        %555 = vmatprep.mubr.bf16.mxu0 0
        %556 = vmatmul.mubr.bf16.gmra.mrb[0].mxu0 %v338
        %v557 = vpop.f32.mrb[0].mxu0
        %v558 = vadd.f32 0.0, %v557
        %v559 = vpop.f32.mrb[0].mxu0
        %v560 = vpop.f32.mrb[0].mxu0
        %v561 = vadd.f32 0.0, %v560
        %v562 = vpop.f32.mrb[0].mxu0
        %563 = vdwg.mxu0
        %564 = vst [vmem:[%s200] sm:$0xff] %v438
        %565 = vst [vmem:[%s200 + $0x8] sm:$0xff] %v441
        %566 = vst [vmem:[%s200 + $0x10] sm:$0xff] %v446
        %567 = vst [vmem:[%s200 + $0x18] sm:$0xff] %v449
        %568 = vst [vmem:[%s200 + $0x20] sm:$0xff] %v454
        %569 = vst [vmem:[%s200 + $0x28] sm:$0xff] %v457
        %570 = vst [vmem:[%s200 + $0x30] sm:$0xff] %v462
        %571 = vst [vmem:[%s200 + $0x38] sm:$0xff] %v465
        %572 = vst [vmem:[%s200 + $0x40] sm:$0xff] %v470
        %573 = vst [vmem:[%s200 + $0x48] sm:$0xff] %v473
        %574 = vst [vmem:[%s200 + $0x50] sm:$0xff] %v478
        %575 = vst [vmem:[%s200 + $0x58] sm:$0xff] %v481
        %576 = vst [vmem:[%s200 + $0x60] sm:$0xff] %v486
        %577 = vst [vmem:[%s200 + $0x68] sm:$0xff] %v489
        %578 = vst [vmem:[%s200 + $0x70] sm:$0xff] %v494
        %579 = vst [vmem:[%s200 + $0x78] sm:$0xff] %v497
        %580 = vst [vmem:[%s200 + $0x80] sm:$0xff] %v502
        %581 = vst [vmem:[%s200 + $0x88] sm:$0xff] %v505
        %582 = vst [vmem:[%s200 + $0x90] sm:$0xff] %v510
        %583 = vst [vmem:[%s200 + $0x98] sm:$0xff] %v513
        %584 = vst [vmem:[%s200 + $0xa0] sm:$0xff] %v518
        %585 = vst [vmem:[%s200 + $0xa8] sm:$0xff] %v521
        %586 = vst [vmem:[%s200 + $0xb0] sm:$0xff] %v526
        %587 = vst [vmem:[%s200 + $0xb8] sm:$0xff] %v529
        %588 = vst [vmem:[%s200 + $0xc0] sm:$0xff] %v534
        %589 = vst [vmem:[%s200 + $0xc8] sm:$0xff] %v537
        %590 = vst [vmem:[%s200 + $0xd0] sm:$0xff] %v542
        %591 = vst [vmem:[%s200 + $0xd8] sm:$0xff] %v545
        %592 = vst [vmem:[%s200 + $0xe0] sm:$0xff] %v550
        %593 = vst [vmem:[%s200 + $0xe8] sm:$0xff] %v553
        %594 = vst [vmem:[%s200 + $0xf0] sm:$0xff] %v558
        %595 = vst [vmem:[%s200 + $0xf8] sm:$0xff] %v561
        %v596 = vadd.f32 %v438, %v441
        %v597 = vadd.f32 %v596, %v446
        %v598 = vadd.f32 %v597, %v449
        %v599 = vadd.f32 %v598, %v454
        %v600 = vadd.f32 %v599, %v457
        %v601 = vadd.f32 %v600, %v462
        %v602 = vadd.f32 %v601, %v465
        %v603 = vadd.f32 %v602, %v470
        %v604 = vadd.f32 %v603, %v473
        %v605 = vadd.f32 %v604, %v478
        %v606 = vadd.f32 %v605, %v481
        %v607 = vadd.f32 %v606, %v486
        %v608 = vadd.f32 %v607, %v489
        %v609 = vadd.f32 %v608, %v494
        %v610 = vadd.f32 %v609, %v497
        %v611 = vadd.f32 %v610, %v502
        %v612 = vadd.f32 %v611, %v505
        %v613 = vadd.f32 %v612, %v510
        %v614 = vadd.f32 %v613, %v513
        %v615 = vadd.f32 %v614, %v518
        %v616 = vadd.f32 %v615, %v521
        %v617 = vadd.f32 %v616, %v526
        %v618 = vadd.f32 %v617, %v529
        %v619 = vadd.f32 %v618, %v534
        %v620 = vadd.f32 %v619, %v537
        %v621 = vadd.f32 %v620, %v542
        %v622 = vadd.f32 %v621, %v545
        %v623 = vadd.f32 %v622, %v550
        %v624 = vadd.f32 %v623, %v553
        %v625 = vadd.f32 %v624, %v558
        %v626 = vadd.f32 %v625, %v561
        %v627 = vrot.slane %v626, 4
        %v628 = vadd.f32 %v626, %v627
        %v629 = vrot.slane %v628, 2
        %v630 = vadd.f32 %v628, %v629
        %v631 = vrot.slane %v630, 1
        %v632 = vadd.f32 %v630, %v631
        %v633 = vmul.f32 %v438, %v438
        %v634 = vmul.f32 %v441, %v441
        %v635 = vmul.f32 %v446, %v446
        %v636 = vmul.f32 %v449, %v449
        %v637 = vmul.f32 %v454, %v454
        %v638 = vmul.f32 %v457, %v457
        %v639 = vmul.f32 %v462, %v462
        %v640 = vmul.f32 %v465, %v465
        %v641 = vmul.f32 %v470, %v470
        %v642 = vmul.f32 %v473, %v473
        %v643 = vmul.f32 %v478, %v478
        %v644 = vmul.f32 %v481, %v481
        %v645 = vmul.f32 %v486, %v486
        %v646 = vmul.f32 %v489, %v489
        %v647 = vmul.f32 %v494, %v494
        %v648 = vmul.f32 %v497, %v497
        %v649 = vmul.f32 %v502, %v502
        %v650 = vmul.f32 %v505, %v505
        %v651 = vmul.f32 %v510, %v510
        %v652 = vmul.f32 %v513, %v513
        %v653 = vmul.f32 %v518, %v518
        %v654 = vmul.f32 %v521, %v521
        %v655 = vmul.f32 %v526, %v526
        %v656 = vmul.f32 %v529, %v529
        %v657 = vmul.f32 %v534, %v534
        %v658 = vmul.f32 %v537, %v537
        %v659 = vmul.f32 %v542, %v542
        %v660 = vmul.f32 %v545, %v545
        %v661 = vmul.f32 %v550, %v550
        %v662 = vmul.f32 %v553, %v553
        %v663 = vmul.f32 %v558, %v558
        %v664 = vmul.f32 %v561, %v561
        %v665 = vadd.f32 %v633, %v634
        %v666 = vadd.f32 %v665, %v635
        %v667 = vadd.f32 %v666, %v636
        %v668 = vadd.f32 %v667, %v637
        %v669 = vadd.f32 %v668, %v638
        %v670 = vadd.f32 %v669, %v639
        %v671 = vadd.f32 %v670, %v640
        %v672 = vadd.f32 %v671, %v641
        %v673 = vadd.f32 %v672, %v642
        %v674 = vadd.f32 %v673, %v643
        %v675 = vadd.f32 %v674, %v644
        %v676 = vadd.f32 %v675, %v645
        %v677 = vadd.f32 %v676, %v646
        %v678 = vadd.f32 %v677, %v647
        %v679 = vadd.f32 %v678, %v648
        %v680 = vadd.f32 %v679, %v649
        %v681 = vadd.f32 %v680, %v650
        %v682 = vadd.f32 %v681, %v651
        %v683 = vadd.f32 %v682, %v652
        %v684 = vadd.f32 %v683, %v653
        %v685 = vadd.f32 %v684, %v654
        %v686 = vadd.f32 %v685, %v655
        %v687 = vadd.f32 %v686, %v656
        %v688 = vadd.f32 %v687, %v657
        %v689 = vadd.f32 %v688, %v658
        %v690 = vadd.f32 %v689, %v659
        %v691 = vadd.f32 %v690, %v660
        %v692 = vadd.f32 %v691, %v661
        %v693 = vadd.f32 %v692, %v662
        %v694 = vadd.f32 %v693, %v663
        %v695 = vadd.f32 %v694, %v664
        %v696 = vrot.slane %v695, 4
        %v697 = vadd.f32 %v695, %v696
        %v698 = vrot.slane %v697, 2
        %v699 = vadd.f32 %v697, %v698
        %v700 = vrot.slane %v699, 1
        %v701 = vadd.f32 %v699, %v700
        %v702 = vld [vmem:[#allocation8] sm:$0x3]
        %vm703 = vcmask 1040384
        %v704 = vsel %vm703, %v632, %v701
        %v705 = vadd.f32 %v702, %v704
        %706 = vst [vmem:[#allocation8] sm:$0x3] %v705
        %s707 = sand.u32 %s78, 1
        %s708 = scalar_lea.sflag [#allocation4], %s707
        %s709 = sand.u32 %s78, 1
        %s710 = smul.addr %s709, 256
        %s711 = scalar_lea.vmem [#allocation7], %s710
        // Predicated region
        $region41: #{tpu_custom_call.1} parent=27 // pred_check
          %p712 = pneg %p88
        $region42: #{tpu_custom_call.1} parent=27 // pred_check_branch
          %714 = sbr.rel (%p712) target = $region44
        $region43: #{tpu_custom_call.1} parent=27 // pred_region
          %s715 = smul.u32 32, %s23
          %s717 = ssub.s32 4096, 4096
          %718 = vsyncadd %s708, %s717
          %s719 = smul.addr %s715, 128
          %s720 = scalar_lea.hbm %s2, %s719
          %s721 = sshll.u32 %s711, 4
          %s722 = int_to_ptr.vmem [resolvable:$true] %s721
          %727 = dma.vmem_to_hbm [thread:$0]  %s722, 4096, %s720, %s708, 128, 128, 8
        $region44: #{tpu_custom_call.1} parent=27 // pred_fallthru
          _
        // Predicated region
        $region45: #{tpu_custom_call.1} parent=27 // pred_check
          %p728 = pneg %p109
        $region46: #{tpu_custom_call.1} parent=27 // pred_check_branch
          %730 = sbr.rel (%p728) target = $region48
        $region47: #{tpu_custom_call.1} parent=27 // pred_region
          %s732 = ssub.s32 32, 32
          %733 = vsyncadd [#allocation9], %s732
          %s735 = sshll.u32 [#allocation8], 4
          %s736 = int_to_ptr.vmem [resolvable:$true] %s735
          %738 = dma.vmem_to_hbm [thread:$0]  %s736, 32, %s3, [#allocation9]
        $region48: #{tpu_custom_call.1} parent=27 // pred_fallthru
          _
        // Predicated region
        $region49: #{tpu_custom_call.1} parent=27 // pred_check
          %p739 = pneg %p109
        $region50: #{tpu_custom_call.1} parent=27 // pred_check_branch
          %741 = sbr.rel (%p739) target = $region52
        $region51: #{tpu_custom_call.1} parent=27 // pred_region
          %742 = dma.done [#allocation9], 32
        $region52: #{tpu_custom_call.1} parent=27 // pred_fallthru
          _
      $region28: #{tpu_custom_call.1} parent=5 // pred_fallthru
        _
      %p743 = scmp.le.s32.totalorder 2, %s18
      // Predicated region
      $region53: #{tpu_custom_call.1} parent=5 // pred_check
        %p744 = pneg %p743
      $region54: #{tpu_custom_call.1} parent=5 // pred_check_branch
        %746 = sbr.rel (%p744) target = $region56
      $region55: #{tpu_custom_call.1} parent=5 // pred_region
        %s747 = ssub.s32 %s18, 2
        // Predicated region
        $region57: #{tpu_custom_call.1} parent=55 // pred_check
          %p748 = pneg %p94
        $region58: #{tpu_custom_call.1} parent=55 // pred_check_branch
          %750 = sbr.rel (%p748) target = $region60
        $region59: #{tpu_custom_call.1} parent=55 // pred_region
          %s751 = sand.u32 %s79, 1
          %s752 = scalar_lea.sflag [#allocation4], %s751
          %s753 = sand.u32 %s79, 1
          %s754 = smul.addr %s753, 256
          %s755 = scalar_lea.vmem [#allocation7], %s754
          %756 = dma.done %s752, 4096
        $region60: #{tpu_custom_call.1} parent=55 // pred_fallthru
          _
      $region56: #{tpu_custom_call.1} parent=5 // pred_fallthru
        _
    $region6: #{tpu_custom_call.1} parent=1 // loop_footer
      %s22 = sadd.s32 1, %s18
    $region7: #{tpu_custom_call.1} parent=1 // loop_footer_branch
      %17 = sbr.rel target = $region3
    $region8: #{tpu_custom_call.1} parent=1 // loop_exit
      _
    %757 = vsyncpa [#allocation3], 1
    %s758 = scalar_lea.sflag [#allocation3], 1
    %759 = vsyncpa %s758, 1
    %760 = vsyncpa [#allocation6], 1
    %761 = vsyncpa [#allocation4], 1
    %s762 = scalar_lea.sflag [#allocation4], 1
    %763 = vsyncpa %s762, 1
    %764 = vsyncpa [#allocation9], 1

</llo_original>
